<compile_context>
chip_gen: v7x
topology: tpu7x:2x2x1
jax: 0.10.0
libtpu: 0.0.40
codegen_flags: <defaults>
</compile_context>

<pallas_src>
from functools import partial

import numpy as np

import jax
import jax.numpy as jnp
from jax.experimental import pallas as pl
from jax.experimental.pallas import tpu as pltpu


# ---------------------------------------------------------------------------
# wrapper-side constant builders (tiny weights-only work; numpy / plain XLA)
# ---------------------------------------------------------------------------

def _fused_phase_weights(w_hwio, W):
    """K[a, t, ci*W + j, co*OW + q].

    For output pixel (2i + a, q) of output channel co:
      y = sum_t sum_{ci,j} x[ci, i + dr(a,t), j] * K[a, t, ci*W + j, co*OW + q]
    with row taps dr(a=0) = (-1, 0), dr(a=1) = (0, +1).  The column map
    M[kw, j, q] = [(q + kw - 1) // 2 == j] folds the width upsample, the kw
    column taps and the SAME zero padding in W; S pre-combines kernel rows
    that hit identical (duplicated) upsampled rows.
    """
    C = w_hwio.shape[2]
    OW = 2 * W
    q = np.arange(OW)
    j = np.arange(W)
    M = np.stack(
        [((q[None, :] + kw - 1) // 2 == j[:, None]).astype(np.float32)
         for kw in range(3)], axis=0)                      # (3, W, OW)

    S = np.zeros((2, 2, 3), np.float32)
    S[0, 0, 0] = 1.0                  # a=0, tap 0: x row i-1, kernel row 0
    S[0, 1, 1] = 1.0
    S[0, 1, 2] = 1.0                  # a=0, tap 1: x row i,   kernel rows 1+2
    S[1, 0, 0] = 1.0
    S[1, 0, 1] = 1.0                  # a=1, tap 0: x row i,   kernel rows 0+1
    S[1, 1, 2] = 1.0                  # a=1, tap 1: x row i+1, kernel row 2

    K = jnp.einsum('ath,hwio,wjq->atijoq',
                   jnp.asarray(S), w_hwio, jnp.asarray(M))  # (2,2,C,W,C,OW)
    return K.reshape(2, 2, C * W, C * OW)


def _row_scatter_conv(H, rb):
    """E[hb, a, t, r, s] = 1 iff output row (hb*OHb + r) has parity a and reads
    input row s = row//2 + dr(a,t).  Rows with s outside [0, H) stay zero ->
    SAME padding in H is free."""
    OH = 2 * H
    OHb = OH // rb
    dr = ((-1, 0), (0, 1))
    E = np.zeros((rb, 2, 2, OHb, H), np.float32)
    for hb in range(rb):
        for r in range(OHb):
            ro = hb * OHb + r
            a, i = ro % 2, ro // 2
            for t in range(2):
                s = i + dr[a][t]
                if 0 <= s < H:
                    E[hb, a, t, r, s] = 1.0
    return jnp.asarray(E)


def _row_dup(H, rb):
    """E[hb, r, s] = 1 iff s == (hb*OHb + r) // 2  (nearest-neighbour rows)."""
    OH = 2 * H
    OHb = OH // rb
    E = np.zeros((rb, OHb, H), np.float32)
    for hb in range(rb):
        for r in range(OHb):
            E[hb, r, (hb * OHb + r) // 2] = 1.0
    return jnp.asarray(E)


def _width_dup_merged(C, W):
    """D[ci*W + j, ci*OW + q] = 1 iff q // 2 == j (nearest columns, per channel)."""
    OW = 2 * W
    D = np.zeros((C * W, C * OW), np.float32)
    for ci in range(C):
        for q in range(OW):
            D[ci * W + q // 2, ci * OW + q] = 1.0
    return jnp.asarray(D)


def _pick_row_blocks(B, OH):
    """Tile output rows so B * row_blocks >= 4 grid steps (both v7x TCs busy,
    DMAs can pipeline); each block must stay a multiple of 8 sublanes."""
    rb = 1
    while B * rb < 4:
        nxt = rb * 2
        if OH % nxt != 0 or (OH // nxt) % 8 != 0:
            break
        rb = nxt
    return rb


# ---------------------------------------------------------------------------
# kernels
# ---------------------------------------------------------------------------

def _upsample_conv_kernel(x_ref, k_ref, e_ref, b_ref, o_ref):
    # x_ref: (1, H, C*W)            input slab (channels merged into lanes)
    # k_ref: (2, 2, C*W, C*OW)      fused phase weights (output channels in N)
    # e_ref: (1, 2, 2, OHb, H)      one-hot row scatter (parity, tap, +-1 shift)
    # b_ref: (1, C*OW)              bias slab
    # o_ref: (1, OHb, C*OW)         lane-dense output slab for this row block
    z = x_ref[0]                                            # (H, C*W)
    acc = None
    for a in range(2):                                      # row parity
        for t in range(2):                                  # row tap
            r = jnp.dot(z, k_ref[a, t],
                        preferred_element_type=jnp.float32)          # (H, C*OW)
            s = jnp.dot(e_ref[0, a, t], r,
                        preferred_element_type=jnp.float32)          # (OHb, C*OW)
            acc = s if acc is None else acc + s
    o_ref[0] = (acc + b_ref[...]).astype(o_ref.dtype)


def _upsample_only_kernel(x_ref, d_ref, e_ref, o_ref):
    # x_ref: (1, H, C*W); d_ref: (C*W, C*OW); e_ref: (1, OHb, H); o_ref: (1, OHb, C*OW)
    wide = jnp.dot(x_ref[0], d_ref[...],
                   preferred_element_type=jnp.float32)                # (H, C*OW)
    o_ref[0] = jnp.dot(e_ref[0], wide,
                       preferred_element_type=jnp.float32).astype(o_ref.dtype)


# ---------------------------------------------------------------------------
# forward wrapper (NCHW in -> NCHW out, matching the PyTorch module)
# ---------------------------------------------------------------------------

@partial(jax.jit, static_argnames=("with_conv",))
def upsample_forward(x_nchw, weight_hwio=None, bias=None, *, with_conv=True):
    """x_nchw: (B, C, H, W) float32. Returns (B, C, 2H, 2W)."""
    B, C, H, W = x_nchw.shape
    OH, OW = 2 * H, 2 * W
    CW, COW = C * W, C * OW

    rb = _pick_row_blocks(B, OH)      # number of output-row blocks per batch
    OHb = OH // rb

    # layout plumbing (not compute): channels into the lane/contraction axis
    x2 = jnp.transpose(x_nchw, (0, 2, 1, 3)).reshape(B, H, CW)   # (B, H, C*W)

    if with_conv:
        K = _fused_phase_weights(weight_hwio, W)                 # (2,2,CW,COW)
        E = _row_scatter_conv(H, rb)                             # (rb,2,2,OHb,H)
        bb = jnp.repeat(bias.astype(jnp.float32), OW).reshape(1, COW)

        out = pl.pallas_call(
            _upsample_conv_kernel,
            out_shape=jax.ShapeDtypeStruct((B, OH, COW), x_nchw.dtype),
            grid_spec=pltpu.PrefetchScalarGridSpec(
                num_scalar_prefetch=0,
                grid=(B, rb),
                in_specs=[
                    pl.BlockSpec((1, H, CW), lambda b, h: (b, 0, 0)),
                    pl.BlockSpec((2, 2, CW, COW), lambda b, h: (0, 0, 0, 0)),
                    pl.BlockSpec((1, 2, 2, OHb, H),
                                 lambda b, h: (h, 0, 0, 0, 0)),
                    pl.BlockSpec((1, COW), lambda b, h: (0, 0)),
                ],
                out_specs=pl.BlockSpec((1, OHb, COW), lambda b, h: (b, h, 0)),
            ),
            compiler_params=pltpu.CompilerParams(
                dimension_semantics=("parallel", "parallel")),
        )(x2, K, E, bb)
    else:
        D = _width_dup_merged(C, W)                              # (CW, COW)
        E = _row_dup(H, rb)                                      # (rb, OHb, H)
        out = pl.pallas_call(
            _upsample_only_kernel,
            out_shape=jax.ShapeDtypeStruct((B, OH, COW), x_nchw.dtype),
            grid_spec=pltpu.PrefetchScalarGridSpec(
                num_scalar_prefetch=0,
                grid=(B, rb),
                in_specs=[
                    pl.BlockSpec((1, H, CW), lambda b, h: (b, 0, 0)),
                    pl.BlockSpec((CW, COW), lambda b, h: (0, 0)),
                    pl.BlockSpec((1, OHb, H), lambda b, h: (h, 0, 0)),
                ],
                out_specs=pl.BlockSpec((1, OHb, COW), lambda b, h: (b, h, 0)),
            ),
            compiler_params=pltpu.CompilerParams(
                dimension_semantics=("parallel", "parallel")),
        )(x2, D, E)

    # layout plumbing: (B, OH, C*OW) [columns co-major] -> NCHW
    return jnp.transpose(out.reshape(B, OH, C, OW), (0, 2, 1, 3))


# ---------------------------------------------------------------------------
# reference + self-test
# ---------------------------------------------------------------------------

def _reference(x_nchw, weight_hwio, bias, with_conv=True):
    x = jnp.repeat(jnp.repeat(x_nchw, 2, axis=2), 2, axis=3)
    if not with_conv:
        return x
    x_nhwc = jnp.transpose(x, (0, 2, 3, 1))
    y = jax.lax.conv_general_dilated(
        x_nhwc, weight_hwio, window_strides=(1, 1), padding="SAME",
        dimension_numbers=("NHWC", "HWIO", "NHWC"))
    y = y + bias[None, None, None, :]
    return jnp.transpose(y, (0, 3, 1, 2))


if __name__ == "__main__":
    key = jax.random.PRNGKey(0)
    B, C, H, W = 2, 4, 16, 16
    k_x, k_w, k_b = jax.random.split(key, 3)

    x = jax.random.normal(k_x, (B, C, H, W), dtype=jnp.float32)

    # deterministic Conv2d(C, C, 3, padding=1) params (kaiming-uniform-like bound)
    fan_in = C * 3 * 3
    bound = 1.0 / (fan_in ** 0.5)
    weight_hwio = jax.random.uniform(k_w, (3, 3, C, C), jnp.float32,
                                     minval=-bound, maxval=bound)
    bias = jax.random.uniform(k_b, (C,), jnp.float32, minval=-bound, maxval=bound)

    out = jax.block_until_ready(
        upsample_forward(x, weight_hwio, bias, with_conv=True))
    ref = _reference(x, weight_hwio, bias, with_conv=True)
    assert out.shape == (B, C, 2 * H, 2 * W)
    assert jnp.allclose(out, ref, atol=1e-4, rtol=1e-4), \
        "mismatch vs reference (with_conv=True)"

    out2 = jax.block_until_ready(upsample_forward(x, with_conv=False))
    ref2 = _reference(x, None, None, with_conv=False)
    assert jnp.allclose(out2, ref2, atol=1e-6, rtol=1e-6), \
        "mismatch vs reference (with_conv=False)"

    print("KERNEL_OK")
</pallas_src>

<mosaic_0001>
module attributes {stable_mosaic.version = 11 : i64} {
  func.func @_upsample_conv_kernel(%arg0: i32, %arg1: i32, %arg2: memref<1x16x64xf32, #tpu.memory_space<vmem>>, %arg3: memref<2x2x64x128xf32, #tpu.memory_space<vmem>>, %arg4: memref<1x2x2x16x16xf32, #tpu.memory_space<vmem>>, %arg5: memref<1x128xf32, #tpu.memory_space<vmem>>, %arg6: memref<1x16x128xf32, #tpu.memory_space<vmem>>) attributes {dimension_semantics = [#tpu.dimension_semantics<parallel>, #tpu.dimension_semantics<parallel>], iteration_bounds = array<i64: 2, 2>, scalar_prefetch = 0 : i64, scratch_operands = 0 : i64, tpu.core_type = #tpu.core_type<tc>, window_params = [{transform_indices = @transform_0, window_bounds = array<i64: 1, 16, 64>}, {pipeline_mode = #tpu.pipeline_mode<synchronous>, transform_indices = @transform_1, window_bounds = array<i64: 2, 2, 64, 128>}, {transform_indices = @transform_2, window_bounds = array<i64: 1, 2, 2, 16, 16>}, {pipeline_mode = #tpu.pipeline_mode<synchronous>, transform_indices = @transform_3, window_bounds = array<i64: 1, 128>}, {transform_indices = @transform_4, window_bounds = array<i64: 1, 16, 128>}]} {
    %c0 = arith.constant 0 : index
    %c0_0 = arith.constant 0 : index
    %c0_1 = arith.constant 0 : index
    %0 = vector.load %arg2[%c0, %c0_0, %c0_1] : memref<1x16x64xf32, #tpu.memory_space<vmem>>, vector<1x16x64xf32>
    %1 = vector.shape_cast %0 : vector<1x16x64xf32> to vector<16x64xf32>
    %c0_2 = arith.constant 0 : index
    %c0_3 = arith.constant 0 : index
    %c0_4 = arith.constant 0 : index
    %c0_5 = arith.constant 0 : index
    %2 = vector.load %arg3[%c0_2, %c0_3, %c0_4, %c0_5] : memref<2x2x64x128xf32, #tpu.memory_space<vmem>>, vector<1x1x64x128xf32>
    %3 = vector.shape_cast %2 : vector<1x1x64x128xf32> to vector<64x128xf32>
    %cst = arith.constant dense<0.000000e+00> : vector<16x128xf32>
    %4 = tpu.matmul %1, %3, %cst {dimension_numbers = #tpu.dot_dimension_numbers<[1], [0], [0], [1], [0, 0, 1, 1], [], []>} : vector<16x64xf32>, vector<64x128xf32>, vector<16x128xf32> -> vector<16x128xf32>
    %c0_6 = arith.constant 0 : index
    %c0_7 = arith.constant 0 : index
    %c0_8 = arith.constant 0 : index
    %c0_9 = arith.constant 0 : index
    %c0_10 = arith.constant 0 : index
    %5 = vector.load %arg4[%c0_6, %c0_7, %c0_8, %c0_9, %c0_10] : memref<1x2x2x16x16xf32, #tpu.memory_space<vmem>>, vector<1x1x1x16x16xf32>
    %6 = vector.shape_cast %5 : vector<1x1x1x16x16xf32> to vector<16x16xf32>
    %cst_11 = arith.constant dense<0.000000e+00> : vector<16x128xf32>
    %7 = tpu.matmul %6, %4, %cst_11 {dimension_numbers = #tpu.dot_dimension_numbers<[1], [0], [0], [1], [0, 0, 1, 1], [], []>} : vector<16x16xf32>, vector<16x128xf32>, vector<16x128xf32> -> vector<16x128xf32>
    %c0_12 = arith.constant 0 : index
    %c1 = arith.constant 1 : index
    %c0_13 = arith.constant 0 : index
    %c0_14 = arith.constant 0 : index
    %8 = vector.load %arg3[%c0_12, %c1, %c0_13, %c0_14] : memref<2x2x64x128xf32, #tpu.memory_space<vmem>>, vector<1x1x64x128xf32>
    %9 = vector.shape_cast %8 : vector<1x1x64x128xf32> to vector<64x128xf32>
    %cst_15 = arith.constant dense<0.000000e+00> : vector<16x128xf32>
    %10 = tpu.matmul %1, %9, %cst_15 {dimension_numbers = #tpu.dot_dimension_numbers<[1], [0], [0], [1], [0, 0, 1, 1], [], []>} : vector<16x64xf32>, vector<64x128xf32>, vector<16x128xf32> -> vector<16x128xf32>
    %c0_16 = arith.constant 0 : index
    %c0_17 = arith.constant 0 : index
    %c1_18 = arith.constant 1 : index
    %c0_19 = arith.constant 0 : index
    %c0_20 = arith.constant 0 : index
    %11 = vector.load %arg4[%c0_16, %c0_17, %c1_18, %c0_19, %c0_20] : memref<1x2x2x16x16xf32, #tpu.memory_space<vmem>>, vector<1x1x1x16x16xf32>
    %12 = vector.shape_cast %11 : vector<1x1x1x16x16xf32> to vector<16x16xf32>
    %cst_21 = arith.constant dense<0.000000e+00> : vector<16x128xf32>
    %13 = tpu.matmul %12, %10, %cst_21 {dimension_numbers = #tpu.dot_dimension_numbers<[1], [0], [0], [1], [0, 0, 1, 1], [], []>} : vector<16x16xf32>, vector<16x128xf32>, vector<16x128xf32> -> vector<16x128xf32>
    %14 = arith.addf %7, %13 : vector<16x128xf32>
    %c1_22 = arith.constant 1 : index
    %c0_23 = arith.constant 0 : index
    %c0_24 = arith.constant 0 : index
    %c0_25 = arith.constant 0 : index
    %15 = vector.load %arg3[%c1_22, %c0_23, %c0_24, %c0_25] : memref<2x2x64x128xf32, #tpu.memory_space<vmem>>, vector<1x1x64x128xf32>
    %16 = vector.shape_cast %15 : vector<1x1x64x128xf32> to vector<64x128xf32>
    %cst_26 = arith.constant dense<0.000000e+00> : vector<16x128xf32>
    %17 = tpu.matmul %1, %16, %cst_26 {dimension_numbers = #tpu.dot_dimension_numbers<[1], [0], [0], [1], [0, 0, 1, 1], [], []>} : vector<16x64xf32>, vector<64x128xf32>, vector<16x128xf32> -> vector<16x128xf32>
    %c0_27 = arith.constant 0 : index
    %c1_28 = arith.constant 1 : index
    %c0_29 = arith.constant 0 : index
    %c0_30 = arith.constant 0 : index
    %c0_31 = arith.constant 0 : index
    %18 = vector.load %arg4[%c0_27, %c1_28, %c0_29, %c0_30, %c0_31] : memref<1x2x2x16x16xf32, #tpu.memory_space<vmem>>, vector<1x1x1x16x16xf32>
    %19 = vector.shape_cast %18 : vector<1x1x1x16x16xf32> to vector<16x16xf32>
    %cst_32 = arith.constant dense<0.000000e+00> : vector<16x128xf32>
    %20 = tpu.matmul %19, %17, %cst_32 {dimension_numbers = #tpu.dot_dimension_numbers<[1], [0], [0], [1], [0, 0, 1, 1], [], []>} : vector<16x16xf32>, vector<16x128xf32>, vector<16x128xf32> -> vector<16x128xf32>
    %21 = arith.addf %14, %20 : vector<16x128xf32>
    %c1_33 = arith.constant 1 : index
    %c1_34 = arith.constant 1 : index
    %c0_35 = arith.constant 0 : index
    %c0_36 = arith.constant 0 : index
    %22 = vector.load %arg3[%c1_33, %c1_34, %c0_35, %c0_36] : memref<2x2x64x128xf32, #tpu.memory_space<vmem>>, vector<1x1x64x128xf32>
    %23 = vector.shape_cast %22 : vector<1x1x64x128xf32> to vector<64x128xf32>
    %cst_37 = arith.constant dense<0.000000e+00> : vector<16x128xf32>
    %24 = tpu.matmul %1, %23, %cst_37 {dimension_numbers = #tpu.dot_dimension_numbers<[1], [0], [0], [1], [0, 0, 1, 1], [], []>} : vector<16x64xf32>, vector<64x128xf32>, vector<16x128xf32> -> vector<16x128xf32>
    %c0_38 = arith.constant 0 : index
    %c1_39 = arith.constant 1 : index
    %c1_40 = arith.constant 1 : index
    %c0_41 = arith.constant 0 : index
    %c0_42 = arith.constant 0 : index
    %25 = vector.load %arg4[%c0_38, %c1_39, %c1_40, %c0_41, %c0_42] : memref<1x2x2x16x16xf32, #tpu.memory_space<vmem>>, vector<1x1x1x16x16xf32>
    %26 = vector.shape_cast %25 : vector<1x1x1x16x16xf32> to vector<16x16xf32>
    %cst_43 = arith.constant dense<0.000000e+00> : vector<16x128xf32>
    %27 = tpu.matmul %26, %24, %cst_43 {dimension_numbers = #tpu.dot_dimension_numbers<[1], [0], [0], [1], [0, 0, 1, 1], [], []>} : vector<16x16xf32>, vector<16x128xf32>, vector<16x128xf32> -> vector<16x128xf32>
    %28 = arith.addf %21, %27 : vector<16x128xf32>
    %c0_44 = arith.constant 0 : index
    %c0_45 = arith.constant 0 : index
    %29 = vector.load %arg5[%c0_44, %c0_45] : memref<1x128xf32, #tpu.memory_space<vmem>>, vector<1x128xf32>
    %30 = vector.broadcast %29 : vector<1x128xf32> to vector<16x128xf32>
    %31 = arith.addf %28, %30 : vector<16x128xf32>
    %c0_46 = arith.constant 0 : index
    %c0_47 = arith.constant 0 : index
    %c0_48 = arith.constant 0 : index
    %32 = vector.load %arg6[%c0_46, %c0_47, %c0_48] : memref<1x16x128xf32, #tpu.memory_space<vmem>>, vector<1x16x128xf32>
    %33 = vector.shape_cast %32 : vector<1x16x128xf32> to vector<16x128xf32>
    %34 = vector.shape_cast %31 : vector<16x128xf32> to vector<1x16x128xf32>
    tpu.vector_store %arg6[%c0_46, %c0_47, %c0_48], %34 {strides = array<i32>} : memref<1x16x128xf32, #tpu.memory_space<vmem>>, vector<1x16x128xf32>,
    return
  }
  func.func @transform_0(%arg0: i32, %arg1: i32) -> (i32, i32, i32) {
    %c0_i32 = arith.constant 0 : i32
    %c0_i32_0 = arith.constant 0 : i32
    %c0_i32_1 = arith.constant 0 : i32
    return %arg0, %c0_i32, %c0_i32_0 : i32, i32, i32
  }
  func.func @transform_1(%arg0: i32, %arg1: i32) -> (i32, i32, i32, i32) {
    %c0_i32 = arith.constant 0 : i32
    %c0_i32_0 = arith.constant 0 : i32
    %c0_i32_1 = arith.constant 0 : i32
    %c0_i32_2 = arith.constant 0 : i32
    %c0_i32_3 = arith.constant 0 : i32
    return %c0_i32, %c0_i32_0, %c0_i32_1, %c0_i32_2 : i32, i32, i32, i32
  }
  func.func @transform_2(%arg0: i32, %arg1: i32) -> (i32, i32, i32, i32, i32) {
    %c0_i32 = arith.constant 0 : i32
    %c0_i32_0 = arith.constant 0 : i32
    %c0_i32_1 = arith.constant 0 : i32
    %c0_i32_2 = arith.constant 0 : i32
    %c0_i32_3 = arith.constant 0 : i32
    return %arg1, %c0_i32, %c0_i32_0, %c0_i32_1, %c0_i32_2 : i32, i32, i32, i32, i32
  }
  func.func @transform_3(%arg0: i32, %arg1: i32) -> (i32, i32) {
    %c0_i32 = arith.constant 0 : i32
    %c0_i32_0 = arith.constant 0 : i32
    %c0_i32_1 = arith.constant 0 : i32
    return %c0_i32, %c0_i32_0 : i32, i32
  }
  func.func @transform_4(%arg0: i32, %arg1: i32) -> (i32, i32, i32) {
    %c0_i32 = arith.constant 0 : i32
    %c0_i32_0 = arith.constant 0 : i32
    return %arg0, %arg1, %c0_i32 : i32, i32, i32
  }
}

</mosaic_0001>

<llo_original>
// kernel: upsample_forward.1
$region0: #{upsample_forward.1}
  #allocation0 [shape = 'u32[]', space=smem, size = 0x4, offset = 0x4, fixed_abs, tag = 'smem constant byte address 0x4 - core index']
  #allocation1 [shape = 'u32[144,128]{1,0:T(1,128)}', space=vmem, size = 0x12000, scoped, tag = 'internal scratch']
  %s0 = inlined_call_operand.vmem [shape: f32[2,16,64], index: 0, kind: input, shape index: {}]
  %s1 = inlined_call_operand.vmem [shape: f32[2,2,64,128], index: 1, kind: input, shape index: {}]
  %s2 = inlined_call_operand.vmem [shape: f32[2,2,2,16,16], index: 2, kind: input, shape index: {}]
  %s3 = inlined_call_operand.vmem [shape: f32[1,128], index: 3, kind: input, shape index: {}]
  %s4 = inlined_call_operand.vmem [shape: f32[2,32,128], index: 4, kind: output, shape index: {}]
  %s5 = sld [smem:[#allocation0]]
  $region49: #{upsample_forward.1} parent=0
    _
  %s7 = ssub.s32 1, %s5
  %s8 = scalar_select 0, %s7, %s5
  loop: start=0, step=1, limit=6
  $region2: #{upsample_forward.1} parent=0 // loop_pre_header
    _
  $region3: #{upsample_forward.1} parent=0 // loop_header
    %s10 = sphi 0, %s14
    %p11 = scmp.ge.s32.totalorder %s10, 6
    %s17 = sphi 0, %s29
    %s18 = sphi 0, %s25
    %s19 = sphi 0, %s17
    %s20 = sphi 0, %s18
    %s21 = sphi 0, %s19
    %s22 = sphi 0, %s20
    %s32 = sphi 0, %s34
    %s35 = sphi 0, %s32
    %s36 = sphi 0, %s35
    %s52 = sphi 0, %s36
    %s56 = sphi 0, %s56
    %s58 = sphi 0, %s56
    %s59 = sphi 0, %s58
    %s73 = sphi 0, %s59
    %s79 = sphi 0, %s81
    %s82 = sphi 0, %s79
    %s83 = sphi 0, %s82
    %s99 = sphi 0, %s83
    %s103 = sphi 0, %s103
    %s105 = sphi 0, %s103
    %s106 = sphi 0, %s105
    %s120 = sphi 0, %s106
    %s128 = sphi 0, %s130
    %s131 = sphi 0, %s128
    %s132 = sphi 0, %s131
    %s148 = sphi 0, %s132
  $region4: #{upsample_forward.1} parent=0 // loop_header_branch
    %13 = sbr.rel (%p11) target = $region8
  $region5: #{upsample_forward.1} parent=0 // loop_body
    %s15 = ssub.s32 %s10, 1
    %s16 = ssub.s32 %s10, 2
    %s23 = sadd.s32 1, %s18
    %p24 = scmp.ge.s32.totalorder %s23, 2
    %s25 = scalar_select %p24, 0, %s23
    %s26 = sadd.s32 1, %s17
    %s27 = scalar_select %p24, %s26, %s17
    %p28 = scmp.ge.s32.totalorder %s27, 2
    %s29 = scalar_select %p28, 0, %s27
    %s30 = ssub.s32 %s17, %s29
    %p31 = scmp.eq.s32.totalorder %s30, 0
    %s33 = sadd.s32 %s32, 1
    %s34 = scalar_select %p31, %s32, %s33
    %p37 = pneg %p31
    %p38 = scmp.eq.s32.totalorder %s10, 3
    %p39 = por %p37, %p38
    %p40 = scmp.ne.s32.totalorder %s32, %s35
    %p41 = scmp.eq.s32.totalorder %s10, 0
    %p42 = por %p40, %p41
    %p43 = scmp.ne.s32.totalorder %s32, %s35
    %p44 = scmp.eq.s32.totalorder %s15, 3
    %p45 = por %p43, %p44
    %p46 = scmp.ne.s32.totalorder %s35, %s36
    %p47 = scmp.eq.s32.totalorder %s15, 0
    %p48 = por %p46, %p47
    %p49 = scmp.ne.s32.totalorder %s35, %s36
    %p50 = scmp.eq.s32.totalorder %s16, 3
    %p51 = por %p49, %p50
    %p53 = scmp.ne.s32.totalorder %s36, %s52
    %p54 = scmp.eq.s32.totalorder %s16, 0
    %p55 = por %p53, %p54
    %s57 = sadd.s32 %s56, 1
    %p60 = scmp.eq.s32.totalorder %s10, 3
    %p61 = scmp.ne.s32.totalorder %s56, %s58
    %p62 = scmp.eq.s32.totalorder %s10, 0
    %p63 = por %p61, %p62
    %p64 = scmp.ne.s32.totalorder %s56, %s58
    %p65 = scmp.eq.s32.totalorder %s15, 3
    %p66 = por %p64, %p65
    %p67 = scmp.ne.s32.totalorder %s58, %s59
    %p68 = scmp.eq.s32.totalorder %s15, 0
    %p69 = por %p67, %p68
    %p70 = scmp.ne.s32.totalorder %s58, %s59
    %p71 = scmp.eq.s32.totalorder %s16, 3
    %p72 = por %p70, %p71
    %p74 = scmp.ne.s32.totalorder %s59, %s73
    %p75 = scmp.eq.s32.totalorder %s16, 0
    %p76 = por %p74, %p75
    %s77 = ssub.s32 %s18, %s25
    %p78 = scmp.eq.s32.totalorder %s77, 0
    %s80 = sadd.s32 %s79, 1
    %s81 = scalar_select %p78, %s79, %s80
    %p84 = pneg %p78
    %p85 = scmp.eq.s32.totalorder %s10, 3
    %p86 = por %p84, %p85
    %p87 = scmp.ne.s32.totalorder %s79, %s82
    %p88 = scmp.eq.s32.totalorder %s10, 0
    %p89 = por %p87, %p88
    %p90 = scmp.ne.s32.totalorder %s79, %s82
    %p91 = scmp.eq.s32.totalorder %s15, 3
    %p92 = por %p90, %p91
    %p93 = scmp.ne.s32.totalorder %s82, %s83
    %p94 = scmp.eq.s32.totalorder %s15, 0
    %p95 = por %p93, %p94
    %p96 = scmp.ne.s32.totalorder %s82, %s83
    %p97 = scmp.eq.s32.totalorder %s16, 3
    %p98 = por %p96, %p97
    %p100 = scmp.ne.s32.totalorder %s83, %s99
    %p101 = scmp.eq.s32.totalorder %s16, 0
    %p102 = por %p100, %p101
    %s104 = sadd.s32 %s103, 1
    %p107 = scmp.eq.s32.totalorder %s10, 3
    %p108 = scmp.ne.s32.totalorder %s103, %s105
    %p109 = scmp.eq.s32.totalorder %s10, 0
    %p110 = por %p108, %p109
    %p111 = scmp.ne.s32.totalorder %s103, %s105
    %p112 = scmp.eq.s32.totalorder %s15, 3
    %p113 = por %p111, %p112
    %p114 = scmp.ne.s32.totalorder %s105, %s106
    %p115 = scmp.eq.s32.totalorder %s15, 0
    %p116 = por %p114, %p115
    %p117 = scmp.ne.s32.totalorder %s105, %s106
    %p118 = scmp.eq.s32.totalorder %s16, 3
    %p119 = por %p117, %p118
    %p121 = scmp.ne.s32.totalorder %s106, %s120
    %p122 = scmp.eq.s32.totalorder %s16, 0
    %p123 = por %p121, %p122
    %s124 = ssub.s32 %s17, %s29
    %s125 = ssub.s32 %s18, %s25
    %s126 = sor.u32 %s124, %s125
    %p127 = scmp.eq.s32.totalorder %s126, 0
    %s129 = sadd.s32 %s128, 1
    %s130 = scalar_select %p127, %s128, %s129
    %p133 = pneg %p127
    %p134 = scmp.eq.s32.totalorder %s10, 3
    %p135 = por %p133, %p134
    %p136 = scmp.ne.s32.totalorder %s128, %s131
    %p137 = scmp.eq.s32.totalorder %s10, 0
    %p138 = por %p136, %p137
    %p139 = scmp.ne.s32.totalorder %s128, %s131
    %p140 = scmp.eq.s32.totalorder %s15, 3
    %p141 = por %p139, %p140
    %p142 = scmp.ne.s32.totalorder %s131, %s132
    %p143 = scmp.eq.s32.totalorder %s15, 0
    %p144 = por %p142, %p143
    %p145 = scmp.ne.s32.totalorder %s131, %s132
    %p146 = scmp.eq.s32.totalorder %s16, 3
    %p147 = por %p145, %p146
    %p149 = scmp.ne.s32.totalorder %s132, %s148
    %p150 = scmp.eq.s32.totalorder %s16, 0
    %p151 = por %p149, %p150
    %p152 = scmp.le.s32.totalorder 1, %s10
    %p153 = scmp.lt.s32.totalorder %s10, 5
    %p154 = pnand %p152, %p153
    %p155 = pneg %p154
    // Predicated region
    $region9: #{upsample_forward.1} parent=5 // pred_check
      _
    $region10: #{upsample_forward.1} parent=5 // pred_check_branch
      %157 = sbr.rel (%p154) target = $region12
    $region11: #{upsample_forward.1} parent=5 // pred_region
      %s158 = ssub.s32 %s10, 1
      // Predicated region
      $region13: #{upsample_forward.1} parent=11 // pred_check
        %p159 = pneg %p69
      $region14: #{upsample_forward.1} parent=11 // pred_check_branch
        %161 = sbr.rel (%p159) target = $region16
      $region15: #{upsample_forward.1} parent=11 // pred_region
        _
      $region16: #{upsample_forward.1} parent=11 // pred_fallthru
        _
      // Predicated region
      $region17: #{upsample_forward.1} parent=11 // pred_check
        %p162 = pneg %p116
      $region18: #{upsample_forward.1} parent=11 // pred_check_branch
        %164 = sbr.rel (%p162) target = $region20
      $region19: #{upsample_forward.1} parent=11 // pred_region
        _
      $region20: #{upsample_forward.1} parent=11 // pred_fallthru
        _
    $region12: #{upsample_forward.1} parent=5 // pred_fallthru
      _
    %p165 = scmp.lt.s32.totalorder %s10, 4
    // Predicated region
    $region21: #{upsample_forward.1} parent=5 // pred_check
      %p166 = pneg %p165
    $region22: #{upsample_forward.1} parent=5 // pred_check_branch
      %168 = sbr.rel (%p166) target = $region24
    $region23: #{upsample_forward.1} parent=5 // pred_region
      // Predicated region
      $region25: #{upsample_forward.1} parent=23 // pred_check
        %p169 = pneg %p42
      $region26: #{upsample_forward.1} parent=23 // pred_check_branch
        %171 = sbr.rel (%p169) target = $region28
      $region27: #{upsample_forward.1} parent=23 // pred_region
        %p172 = scmp.lt.s32.totalorder %s17, 1
        %s173 = scalar_select %p172, %s17, 1
        %s174 = smul.addr %s173, 2
        %s175 = smul.addr %s174, 8
        %s176 = scalar_lea.vmem %s0, %s175
      $region28: #{upsample_forward.1} parent=23 // pred_fallthru
        _
      // Predicated region
      $region29: #{upsample_forward.1} parent=23 // pred_check
        %p177 = pneg %p89
      $region30: #{upsample_forward.1} parent=23 // pred_check_branch
        %179 = sbr.rel (%p177) target = $region32
      $region31: #{upsample_forward.1} parent=23 // pred_region
        %p180 = scmp.lt.s32.totalorder %s18, 1
        %s181 = scalar_select %p180, %s18, 1
        %s182 = smul.addr %s181, 8
        %s183 = smul.addr %s182, 8
        %s184 = scalar_lea.vmem %s2, %s183
      $region32: #{upsample_forward.1} parent=23 // pred_fallthru
        _
    $region24: #{upsample_forward.1} parent=5 // pred_fallthru
      _
    %p185 = scmp.le.s32.totalorder 1, %s10
    %p186 = scmp.lt.s32.totalorder %s10, 5
    %p187 = pnand %p185, %p186
    %p188 = pneg %p187
    // Predicated region
    $region33: #{upsample_forward.1} parent=5 // pred_check
      _
    $region34: #{upsample_forward.1} parent=5 // pred_check_branch
      %190 = sbr.rel (%p187) target = $region36
    $region35: #{upsample_forward.1} parent=5 // pred_region
      %s191 = ssub.s32 %s10, 1
      %p192 = scmp.lt.s32.totalorder %s19, 1
      %s193 = scalar_select %p192, %s19, 1
      %s194 = smul.addr %s193, 2
      %s195 = smul.addr %s194, 8
      %s196 = scalar_lea.vmem %s0, %s195
      %p197 = pneg %p48
      %p198 = pneg %p45
      %p199 = pneg %p69
      %p200 = pneg %p66
      %p201 = scmp.lt.s32.totalorder %s20, 1
      %s202 = scalar_select %p201, %s20, 1
      %s203 = smul.addr %s202, 8
      %s204 = smul.addr %s203, 8
      %s205 = scalar_lea.vmem %s2, %s204
      %p206 = pneg %p95
      %p207 = pneg %p92
      %p208 = pneg %p116
      %p209 = pneg %p113
      %p210 = pneg %p144
      %p211 = pneg %p141
      %s212 = smul.u32 2, %s20
      %p213 = scmp.lt.s32.totalorder %s19, 1
      %s214 = scalar_select %p213, %s19, 1
      %p215 = scmp.lt.s32.totalorder %s212, 3
      %s216 = scalar_select %p215, %s212, 3
      %s217 = smul.addr %s214, 4
      %s218 = sadd.s32 %s216, %s217
      %s219 = smul.addr %s218, 8
      %s220 = scalar_lea.vmem %s4, %s219
      %p221 = scmp.lt.s32.totalorder %s19, 1
      %s222 = scalar_select %p221, %s19, 1
      %s223 = smul.addr %s222, 2
      %s224 = smul.addr %s223, 8
      %s225 = scalar_lea.vmem %s0, %s224
      %p226 = scmp.lt.s32.totalorder %s20, 1
      %s227 = scalar_select %p226, %s20, 1
      %s228 = smul.addr %s227, 8
      %s229 = smul.addr %s228, 8
      %s230 = scalar_lea.vmem %s2, %s229
      %s231 = smul.u32 2, %s20
      %p232 = scmp.lt.s32.totalorder %s19, 1
      %s233 = scalar_select %p232, %s19, 1
      %p234 = scmp.lt.s32.totalorder %s231, 3
      %s235 = scalar_select %p234, %s231, 3
      %s236 = smul.addr %s233, 4
      %s237 = sadd.s32 %s235, %s236
      %s238 = smul.addr %s237, 8
      %s239 = scalar_lea.vmem %s4, %s238
      %s240 = smul.u32 2, %s20
      %v241 = vld [vmem:[%s225] sm:$0xff]
      %v242 = vld [vmem:[%s225 + $0x8] sm:$0xff]
      %v243 = vld [vmem:[%s1] sm:$0xff]
      %v244 = vld [vmem:[%s1 + $0x8] sm:$0xff]
      %v245 = vld [vmem:[%s1 + $0x10] sm:$0xff]
      %v246 = vld [vmem:[%s1 + $0x18] sm:$0xff]
      %v247 = vld [vmem:[%s1 + $0x20] sm:$0xff]
      %v248 = vld [vmem:[%s1 + $0x28] sm:$0xff]
      %v249 = vld [vmem:[%s1 + $0x30] sm:$0xff]
      %v250 = vld [vmem:[%s1 + $0x38] sm:$0xff]
      %vm251 = vcmask 523264
      %v253 = vsel %vm251, %v241, 0
      %v256 = vsel %vm251, %v242, 0
      %258 = vmatprep.subr.mxu0 0.0
      %259 = vmatpush1.msra.mxu0 %v243
      %260 = vmatprep.subr.mxu0 0.0
      %261 = vmatpush1.msra.mxu0 %v244
      %262 = vmatprep.subr.mxu0 0.0
      %263 = vmatpush1.msra.mxu0 %v245
      %264 = vmatprep.subr.mxu0 0.0
      %265 = vmatpush1.msra.mxu0 %v246
      %266 = vmatprep.subr.mxu0 0.0
      %267 = vmatpush1.msra.mxu0 %v247
      %268 = vmatprep.subr.mxu0 0.0
      %269 = vmatpush1.msra.mxu0 %v248
      %270 = vmatprep.subr.mxu0 0.0
      %271 = vmatpush1.msra.mxu0 %v249
      %272 = vmatprep.subr.mxu0 0.0
      %273 = vmatpush1.msra.mxu0 %v250
      %274 = vmatprep.subr.mxu0 0.0
      %275 = vmatpush1.msra.mxu0 0.0
      %276 = vmatprep.subr.mxu0 0.0
      %277 = vmatpush1.msra.mxu0 0.0
      %278 = vmatprep.subr.mxu0 0.0
      %279 = vmatpush1.msra.mxu0 0.0
      %280 = vmatprep.subr.mxu0 0.0
      %281 = vmatpush1.msra.mxu0 0.0
      %282 = vmatprep.subr.mxu0 0.0
      %283 = vmatpush1.msra.mxu0 0.0
      %284 = vmatprep.subr.mxu0 0.0
      %285 = vmatpush1.msra.mxu0 0.0
      %286 = vmatprep.subr.mxu0 0.0
      %287 = vmatpush1.msra.mxu0 0.0
      %288 = vmatprep.subr.mxu0 0.0
      %289 = vmatpush1.msra.mxu0 0.0
      %290 = vmatprep.subr.mxu0 0.0
      %291 = vmatpush1.msra.mxu0 0.0
      %292 = vmatprep.subr.mxu0 0.0
      %293 = vmatpush1.msra.mxu0 0.0
      %294 = vmatprep.subr.mxu0 0.0
      %295 = vmatpush1.msra.mxu0 0.0
      %296 = vmatprep.subr.mxu0 0.0
      %297 = vmatpush1.msra.mxu0 0.0
      %298 = vmatprep.subr.mxu0 0.0
      %299 = vmatpush1.msra.mxu0 0.0
      %300 = vmatprep.subr.mxu0 0.0
      %301 = vmatpush1.msra.mxu0 0.0
      %302 = vmatprep.subr.mxu0 0.0
      %303 = vmatpush1.msra.mxu0 0.0
      %304 = vmatprep.subr.mxu0 0.0
      %305 = vmatpush1.msra.mxu0 0.0
      %306 = vmatprep.subr.mxu0 0.0
      %307 = vmatpush1.msra.mxu0 0.0
      %308 = vmatprep.subr.mxu0 0.0
      %309 = vmatpush1.msra.mxu0 0.0
      %310 = vmatprep.subr.mxu0 0.0
      %311 = vmatpush1.msra.mxu0 0.0
      %312 = vmatprep.subr.mxu0 0.0
      %313 = vmatpush1.msra.mxu0 0.0
      %314 = vmatprep.subr.mxu0 0.0
      %315 = vmatpush1.msra.mxu0 0.0
      %316 = vmatprep.subr.mxu0 0.0
      %317 = vmatpush1.msra.mxu0 0.0
      %318 = vmatprep.subr.mxu0 0.0
      %319 = vmatpush1.msra.mxu0 0.0
      %320 = vmatprep.subr.mxu0 0.0
      %321 = vmatpush1.msra.mxu0 0.0
      %322 = vmatprep.mubr.f32.mxu0 0.0
      %323 = vmatmul.mubr.f32.gmra.mrb[0].mxu0 %v253
      %v324 = vpop.f32.mrb[0].mxu0
      %v325 = vadd.f32 0.0, %v324
      %v326 = vpop.f32.mrb[0].mxu0
      %327 = vmatprep.mubr.f32.mxu0 0.0
      %328 = vmatmul.mubr.f32.gmra.mrb[0].mxu0 %v256
      %v329 = vpop.f32.mrb[0].mxu0
      %v330 = vadd.f32 0.0, %v329
      %v331 = vpop.f32.mrb[0].mxu0
      %332 = vdwg.mxu0
      %v333 = vld [vmem:[%s230] sm:$0xff]
      %v334 = vld [vmem:[%s230 + $0x8] sm:$0xff]
      %s335 = scalar_lea.vmem %s1, 64
      %v336 = vld [vmem:[%s335] sm:$0xff]
      %v337 = vld [vmem:[%s335 + $0x8] sm:$0xff]
      %v338 = vld [vmem:[%s335 + $0x10] sm:$0xff]
      %v339 = vld [vmem:[%s335 + $0x18] sm:$0xff]
      %v340 = vld [vmem:[%s335 + $0x20] sm:$0xff]
      %v341 = vld [vmem:[%s335 + $0x28] sm:$0xff]
      %v342 = vld [vmem:[%s335 + $0x30] sm:$0xff]
      %v343 = vld [vmem:[%s335 + $0x38] sm:$0xff]
      %344 = vmatprep.subr.mxu0 0.0
      %345 = vmatpush1.msra.mxu0 %v336
      %346 = vmatprep.subr.mxu0 0.0
      %347 = vmatpush1.msra.mxu0 %v337
      %348 = vmatprep.subr.mxu0 0.0
      %349 = vmatpush1.msra.mxu0 %v338
      %350 = vmatprep.subr.mxu0 0.0
      %351 = vmatpush1.msra.mxu0 %v339
      %352 = vmatprep.subr.mxu0 0.0
      %353 = vmatpush1.msra.mxu0 %v340
      %354 = vmatprep.subr.mxu0 0.0
      %355 = vmatpush1.msra.mxu0 %v341
      %356 = vmatprep.subr.mxu0 0.0
      %357 = vmatpush1.msra.mxu0 %v342
      %358 = vmatprep.subr.mxu0 0.0
      %359 = vmatpush1.msra.mxu0 %v343
      %360 = vmatprep.subr.mxu0 0.0
      %361 = vmatpush1.msra.mxu0 0.0
      %362 = vmatprep.subr.mxu0 0.0
      %363 = vmatpush1.msra.mxu0 0.0
      %364 = vmatprep.subr.mxu0 0.0
      %365 = vmatpush1.msra.mxu0 0.0
      %366 = vmatprep.subr.mxu0 0.0
      %367 = vmatpush1.msra.mxu0 0.0
      %368 = vmatprep.subr.mxu0 0.0
      %369 = vmatpush1.msra.mxu0 0.0
      %370 = vmatprep.subr.mxu0 0.0
      %371 = vmatpush1.msra.mxu0 0.0
      %372 = vmatprep.subr.mxu0 0.0
      %373 = vmatpush1.msra.mxu0 0.0
      %374 = vmatprep.subr.mxu0 0.0
      %375 = vmatpush1.msra.mxu0 0.0
      %376 = vmatprep.subr.mxu0 0.0
      %377 = vmatpush1.msra.mxu0 0.0
      %378 = vmatprep.subr.mxu0 0.0
      %379 = vmatpush1.msra.mxu0 0.0
      %380 = vmatprep.subr.mxu0 0.0
      %381 = vmatpush1.msra.mxu0 0.0
      %382 = vmatprep.subr.mxu0 0.0
      %383 = vmatpush1.msra.mxu0 0.0
      %384 = vmatprep.subr.mxu0 0.0
      %385 = vmatpush1.msra.mxu0 0.0
      %386 = vmatprep.subr.mxu0 0.0
      %387 = vmatpush1.msra.mxu0 0.0
      %388 = vmatprep.subr.mxu0 0.0
      %389 = vmatpush1.msra.mxu0 0.0
      %390 = vmatprep.subr.mxu0 0.0
      %391 = vmatpush1.msra.mxu0 0.0
      %392 = vmatprep.subr.mxu0 0.0
      %393 = vmatpush1.msra.mxu0 0.0
      %394 = vmatprep.subr.mxu0 0.0
      %395 = vmatpush1.msra.mxu0 0.0
      %396 = vmatprep.subr.mxu0 0.0
      %397 = vmatpush1.msra.mxu0 0.0
      %398 = vmatprep.subr.mxu0 0.0
      %399 = vmatpush1.msra.mxu0 0.0
      %400 = vmatprep.subr.mxu0 0.0
      %401 = vmatpush1.msra.mxu0 0.0
      %402 = vmatprep.subr.mxu0 0.0
      %403 = vmatpush1.msra.mxu0 0.0
      %404 = vmatprep.subr.mxu0 0.0
      %405 = vmatpush1.msra.mxu0 0.0
      %406 = vmatprep.subr.mxu0 0.0
      %407 = vmatpush1.msra.mxu0 0.0
      %408 = vmatprep.mubr.f32.mxu0 0.0
      %409 = vmatmul.mubr.f32.gmra.mrb[0].mxu0 %v253
      %v410 = vpop.f32.mrb[0].mxu0
      %v411 = vadd.f32 0.0, %v410
      %v412 = vpop.f32.mrb[0].mxu0
      %413 = vmatprep.mubr.f32.mxu0 0.0
      %414 = vmatmul.mubr.f32.gmra.mrb[0].mxu0 %v256
      %v415 = vpop.f32.mrb[0].mxu0
      %v416 = vadd.f32 0.0, %v415
      %v417 = vpop.f32.mrb[0].mxu0
      %418 = vdwg.mxu0
      %s419 = scalar_lea.vmem %s230, 16
      %v420 = vld [vmem:[%s419] sm:$0xff]
      %v421 = vld [vmem:[%s419 + $0x8] sm:$0xff]
      %vm422 = vcmask 130048
      %v424 = vsel %vm422, %v420, 0
      %v427 = vsel %vm422, %v421, 0
      %429 = vmatprep.subr.mxu0 0.0
      %430 = vmatpush1.msra.mxu0 %v411
      %431 = vmatprep.subr.mxu0 0.0
      %432 = vmatpush1.msra.mxu0 %v416
      %433 = vmatprep.subr.mxu0 0.0
      %434 = vmatpush1.msra.mxu0 0.0
      %435 = vmatprep.subr.mxu0 0.0
      %436 = vmatpush1.msra.mxu0 0.0
      %437 = vmatprep.subr.mxu0 0.0
      %438 = vmatpush1.msra.mxu0 0.0
      %439 = vmatprep.subr.mxu0 0.0
      %440 = vmatpush1.msra.mxu0 0.0
      %441 = vmatprep.subr.mxu0 0.0
      %442 = vmatpush1.msra.mxu0 0.0
      %443 = vmatprep.subr.mxu0 0.0
      %444 = vmatpush1.msra.mxu0 0.0
      %445 = vmatprep.subr.mxu0 0.0
      %446 = vmatpush1.msra.mxu0 0.0
      %447 = vmatprep.subr.mxu0 0.0
      %448 = vmatpush1.msra.mxu0 0.0
      %449 = vmatprep.subr.mxu0 0.0
      %450 = vmatpush1.msra.mxu0 0.0
      %451 = vmatprep.subr.mxu0 0.0
      %452 = vmatpush1.msra.mxu0 0.0
      %453 = vmatprep.subr.mxu0 0.0
      %454 = vmatpush1.msra.mxu0 0.0
      %455 = vmatprep.subr.mxu0 0.0
      %456 = vmatpush1.msra.mxu0 0.0
      %457 = vmatprep.subr.mxu0 0.0
      %458 = vmatpush1.msra.mxu0 0.0
      %459 = vmatprep.subr.mxu0 0.0
      %460 = vmatpush1.msra.mxu0 0.0
      %461 = vmatprep.subr.mxu0 0.0
      %462 = vmatpush1.msra.mxu0 0.0
      %463 = vmatprep.subr.mxu0 0.0
      %464 = vmatpush1.msra.mxu0 0.0
      %465 = vmatprep.subr.mxu0 0.0
      %466 = vmatpush1.msra.mxu0 0.0
      %467 = vmatprep.subr.mxu0 0.0
      %468 = vmatpush1.msra.mxu0 0.0
      %469 = vmatprep.subr.mxu0 0.0
      %470 = vmatpush1.msra.mxu0 0.0
      %471 = vmatprep.subr.mxu0 0.0
      %472 = vmatpush1.msra.mxu0 0.0
      %473 = vmatprep.subr.mxu0 0.0
      %474 = vmatpush1.msra.mxu0 0.0
      %475 = vmatprep.subr.mxu0 0.0
      %476 = vmatpush1.msra.mxu0 0.0
      %477 = vmatprep.subr.mxu0 0.0
      %478 = vmatpush1.msra.mxu0 0.0
      %479 = vmatprep.subr.mxu0 0.0
      %480 = vmatpush1.msra.mxu0 0.0
      %481 = vmatprep.subr.mxu0 0.0
      %482 = vmatpush1.msra.mxu0 0.0
      %483 = vmatprep.subr.mxu0 0.0
      %484 = vmatpush1.msra.mxu0 0.0
      %485 = vmatprep.subr.mxu0 0.0
      %486 = vmatpush1.msra.mxu0 0.0
      %487 = vmatprep.subr.mxu0 0.0
      %488 = vmatpush1.msra.mxu0 0.0
      %489 = vmatprep.subr.mxu0 0.0
      %490 = vmatpush1.msra.mxu0 0.0
      %491 = vmatprep.subr.mxu0 0.0
      %492 = vmatpush1.msra.mxu0 0.0
      %493 = vmatprep.mubr.f32.mxu0 0.0
      %494 = vmatmul.mubr.f32.gmra.mrb[0].mxu0 %v424
      %v495 = vpop.f32.mrb[0].mxu0
      %v496 = vadd.f32 0.0, %v495
      %v497 = vpop.f32.mrb[0].mxu0
      %498 = vmatprep.mubr.f32.mxu0 0.0
      %499 = vmatmul.mubr.f32.gmra.mrb[0].mxu0 %v427
      %v500 = vpop.f32.mrb[0].mxu0
      %v501 = vadd.f32 0.0, %v500
      %v502 = vpop.f32.mrb[0].mxu0
      %503 = vdwg.mxu0
      %v505 = vsel %vm422, %v333, 0
      %v508 = vsel %vm422, %v334, 0
      %510 = vmatprep.subr.mxu0 0.0
      %511 = vmatpush1.msra.mxu0 %v325
      %512 = vmatprep.subr.mxu0 0.0
      %513 = vmatpush1.msra.mxu0 %v330
      %514 = vmatprep.subr.mxu0 0.0
      %515 = vmatpush1.msra.mxu0 0.0
      %516 = vmatprep.subr.mxu0 0.0
      %517 = vmatpush1.msra.mxu0 0.0
      %518 = vmatprep.subr.mxu0 0.0
      %519 = vmatpush1.msra.mxu0 0.0
      %520 = vmatprep.subr.mxu0 0.0
      %521 = vmatpush1.msra.mxu0 0.0
      %522 = vmatprep.subr.mxu0 0.0
      %523 = vmatpush1.msra.mxu0 0.0
      %524 = vmatprep.subr.mxu0 0.0
      %525 = vmatpush1.msra.mxu0 0.0
      %526 = vmatprep.subr.mxu0 0.0
      %527 = vmatpush1.msra.mxu0 0.0
      %528 = vmatprep.subr.mxu0 0.0
      %529 = vmatpush1.msra.mxu0 0.0
      %530 = vmatprep.subr.mxu0 0.0
      %531 = vmatpush1.msra.mxu0 0.0
      %532 = vmatprep.subr.mxu0 0.0
      %533 = vmatpush1.msra.mxu0 0.0
      %534 = vmatprep.subr.mxu0 0.0
      %535 = vmatpush1.msra.mxu0 0.0
      %536 = vmatprep.subr.mxu0 0.0
      %537 = vmatpush1.msra.mxu0 0.0
      %538 = vmatprep.subr.mxu0 0.0
      %539 = vmatpush1.msra.mxu0 0.0
      %540 = vmatprep.subr.mxu0 0.0
      %541 = vmatpush1.msra.mxu0 0.0
      %542 = vmatprep.subr.mxu0 0.0
      %543 = vmatpush1.msra.mxu0 0.0
      %544 = vmatprep.subr.mxu0 0.0
      %545 = vmatpush1.msra.mxu0 0.0
      %546 = vmatprep.subr.mxu0 0.0
      %547 = vmatpush1.msra.mxu0 0.0
      %548 = vmatprep.subr.mxu0 0.0
      %549 = vmatpush1.msra.mxu0 0.0
      %550 = vmatprep.subr.mxu0 0.0
      %551 = vmatpush1.msra.mxu0 0.0
      %552 = vmatprep.subr.mxu0 0.0
      %553 = vmatpush1.msra.mxu0 0.0
      %554 = vmatprep.subr.mxu0 0.0
      %555 = vmatpush1.msra.mxu0 0.0
      %556 = vmatprep.subr.mxu0 0.0
      %557 = vmatpush1.msra.mxu0 0.0
      %558 = vmatprep.subr.mxu0 0.0
      %559 = vmatpush1.msra.mxu0 0.0
      %560 = vmatprep.subr.mxu0 0.0
      %561 = vmatpush1.msra.mxu0 0.0
      %562 = vmatprep.subr.mxu0 0.0
      %563 = vmatpush1.msra.mxu0 0.0
      %564 = vmatprep.subr.mxu0 0.0
      %565 = vmatpush1.msra.mxu0 0.0
      %566 = vmatprep.subr.mxu0 0.0
      %567 = vmatpush1.msra.mxu0 0.0
      %568 = vmatprep.subr.mxu0 0.0
      %569 = vmatpush1.msra.mxu0 0.0
      %570 = vmatprep.subr.mxu0 0.0
      %571 = vmatpush1.msra.mxu0 0.0
      %572 = vmatprep.subr.mxu0 0.0
      %573 = vmatpush1.msra.mxu0 0.0
      %574 = vmatprep.mubr.f32.mxu0 0.0
      %575 = vmatmul.mubr.f32.gmra.mrb[0].mxu0 %v505
      %v576 = vpop.f32.mrb[0].mxu0
      %v577 = vadd.f32 %v496, %v576
      %v578 = vpop.f32.mrb[0].mxu0
      %579 = vmatprep.mubr.f32.mxu0 0.0
      %580 = vmatmul.mubr.f32.gmra.mrb[0].mxu0 %v508
      %v581 = vpop.f32.mrb[0].mxu0
      %v582 = vadd.f32 %v501, %v581
      %v583 = vpop.f32.mrb[0].mxu0
      %584 = vdwg.mxu0
      %s585 = scalar_lea.vmem %s1, 128
      %v586 = vld [vmem:[%s585] sm:$0xff]
      %v587 = vld [vmem:[%s585 + $0x8] sm:$0xff]
      %v588 = vld [vmem:[%s585 + $0x10] sm:$0xff]
      %v589 = vld [vmem:[%s585 + $0x18] sm:$0xff]
      %v590 = vld [vmem:[%s585 + $0x20] sm:$0xff]
      %v591 = vld [vmem:[%s585 + $0x28] sm:$0xff]
      %v592 = vld [vmem:[%s585 + $0x30] sm:$0xff]
      %v593 = vld [vmem:[%s585 + $0x38] sm:$0xff]
      %594 = vmatprep.subr.mxu0 0.0
      %595 = vmatpush1.msra.mxu0 %v586
      %596 = vmatprep.subr.mxu0 0.0
      %597 = vmatpush1.msra.mxu0 %v587
      %598 = vmatprep.subr.mxu0 0.0
      %599 = vmatpush1.msra.mxu0 %v588
      %600 = vmatprep.subr.mxu0 0.0
      %601 = vmatpush1.msra.mxu0 %v589
      %602 = vmatprep.subr.mxu0 0.0
      %603 = vmatpush1.msra.mxu0 %v590
      %604 = vmatprep.subr.mxu0 0.0
      %605 = vmatpush1.msra.mxu0 %v591
      %606 = vmatprep.subr.mxu0 0.0
      %607 = vmatpush1.msra.mxu0 %v592
      %608 = vmatprep.subr.mxu0 0.0
      %609 = vmatpush1.msra.mxu0 %v593
      %610 = vmatprep.subr.mxu0 0.0
      %611 = vmatpush1.msra.mxu0 0.0
      %612 = vmatprep.subr.mxu0 0.0
      %613 = vmatpush1.msra.mxu0 0.0
      %614 = vmatprep.subr.mxu0 0.0
      %615 = vmatpush1.msra.mxu0 0.0
      %616 = vmatprep.subr.mxu0 0.0
      %617 = vmatpush1.msra.mxu0 0.0
      %618 = vmatprep.subr.mxu0 0.0
      %619 = vmatpush1.msra.mxu0 0.0
      %620 = vmatprep.subr.mxu0 0.0
      %621 = vmatpush1.msra.mxu0 0.0
      %622 = vmatprep.subr.mxu0 0.0
      %623 = vmatpush1.msra.mxu0 0.0
      %624 = vmatprep.subr.mxu0 0.0
      %625 = vmatpush1.msra.mxu0 0.0
      %626 = vmatprep.subr.mxu0 0.0
      %627 = vmatpush1.msra.mxu0 0.0
      %628 = vmatprep.subr.mxu0 0.0
      %629 = vmatpush1.msra.mxu0 0.0
      %630 = vmatprep.subr.mxu0 0.0
      %631 = vmatpush1.msra.mxu0 0.0
      %632 = vmatprep.subr.mxu0 0.0
      %633 = vmatpush1.msra.mxu0 0.0
      %634 = vmatprep.subr.mxu0 0.0
      %635 = vmatpush1.msra.mxu0 0.0
      %636 = vmatprep.subr.mxu0 0.0
      %637 = vmatpush1.msra.mxu0 0.0
      %638 = vmatprep.subr.mxu0 0.0
      %639 = vmatpush1.msra.mxu0 0.0
      %640 = vmatprep.subr.mxu0 0.0
      %641 = vmatpush1.msra.mxu0 0.0
      %642 = vmatprep.subr.mxu0 0.0
      %643 = vmatpush1.msra.mxu0 0.0
      %644 = vmatprep.subr.mxu0 0.0
      %645 = vmatpush1.msra.mxu0 0.0
      %646 = vmatprep.subr.mxu0 0.0
      %647 = vmatpush1.msra.mxu0 0.0
      %648 = vmatprep.subr.mxu0 0.0
      %649 = vmatpush1.msra.mxu0 0.0
      %650 = vmatprep.subr.mxu0 0.0
      %651 = vmatpush1.msra.mxu0 0.0
      %652 = vmatprep.subr.mxu0 0.0
      %653 = vmatpush1.msra.mxu0 0.0
      %654 = vmatprep.subr.mxu0 0.0
      %655 = vmatpush1.msra.mxu0 0.0
      %656 = vmatprep.subr.mxu0 0.0
      %657 = vmatpush1.msra.mxu0 0.0
      %658 = vmatprep.mubr.f32.mxu0 0.0
      %659 = vmatmul.mubr.f32.gmra.mrb[0].mxu0 %v253
      %v660 = vpop.f32.mrb[0].mxu0
      %v661 = vadd.f32 0.0, %v660
      %v662 = vpop.f32.mrb[0].mxu0
      %663 = vmatprep.mubr.f32.mxu0 0.0
      %664 = vmatmul.mubr.f32.gmra.mrb[0].mxu0 %v256
      %v665 = vpop.f32.mrb[0].mxu0
      %v666 = vadd.f32 0.0, %v665
      %v667 = vpop.f32.mrb[0].mxu0
      %668 = vdwg.mxu0
      %s669 = scalar_lea.vmem %s230, 32
      %v670 = vld [vmem:[%s669] sm:$0xff]
      %v671 = vld [vmem:[%s669 + $0x8] sm:$0xff]
      %v673 = vsel %vm422, %v670, 0
      %v676 = vsel %vm422, %v671, 0
      %678 = vmatprep.subr.mxu0 0.0
      %679 = vmatpush1.msra.mxu0 %v661
      %680 = vmatprep.subr.mxu0 0.0
      %681 = vmatpush1.msra.mxu0 %v666
      %682 = vmatprep.subr.mxu0 0.0
      %683 = vmatpush1.msra.mxu0 0.0
      %684 = vmatprep.subr.mxu0 0.0
      %685 = vmatpush1.msra.mxu0 0.0
      %686 = vmatprep.subr.mxu0 0.0
      %687 = vmatpush1.msra.mxu0 0.0
      %688 = vmatprep.subr.mxu0 0.0
      %689 = vmatpush1.msra.mxu0 0.0
      %690 = vmatprep.subr.mxu0 0.0
      %691 = vmatpush1.msra.mxu0 0.0
      %692 = vmatprep.subr.mxu0 0.0
      %693 = vmatpush1.msra.mxu0 0.0
      %694 = vmatprep.subr.mxu0 0.0
      %695 = vmatpush1.msra.mxu0 0.0
      %696 = vmatprep.subr.mxu0 0.0
      %697 = vmatpush1.msra.mxu0 0.0
      %698 = vmatprep.subr.mxu0 0.0
      %699 = vmatpush1.msra.mxu0 0.0
      %700 = vmatprep.subr.mxu0 0.0
      %701 = vmatpush1.msra.mxu0 0.0
      %702 = vmatprep.subr.mxu0 0.0
      %703 = vmatpush1.msra.mxu0 0.0
      %704 = vmatprep.subr.mxu0 0.0
      %705 = vmatpush1.msra.mxu0 0.0
      %706 = vmatprep.subr.mxu0 0.0
      %707 = vmatpush1.msra.mxu0 0.0
      %708 = vmatprep.subr.mxu0 0.0
      %709 = vmatpush1.msra.mxu0 0.0
      %710 = vmatprep.subr.mxu0 0.0
      %711 = vmatpush1.msra.mxu0 0.0
      %712 = vmatprep.subr.mxu0 0.0
      %713 = vmatpush1.msra.mxu0 0.0
      %714 = vmatprep.subr.mxu0 0.0
      %715 = vmatpush1.msra.mxu0 0.0
      %716 = vmatprep.subr.mxu0 0.0
      %717 = vmatpush1.msra.mxu0 0.0
      %718 = vmatprep.subr.mxu0 0.0
      %719 = vmatpush1.msra.mxu0 0.0
      %720 = vmatprep.subr.mxu0 0.0
      %721 = vmatpush1.msra.mxu0 0.0
      %722 = vmatprep.subr.mxu0 0.0
      %723 = vmatpush1.msra.mxu0 0.0
      %724 = vmatprep.subr.mxu0 0.0
      %725 = vmatpush1.msra.mxu0 0.0
      %726 = vmatprep.subr.mxu0 0.0
      %727 = vmatpush1.msra.mxu0 0.0
      %728 = vmatprep.subr.mxu0 0.0
      %729 = vmatpush1.msra.mxu0 0.0
      %730 = vmatprep.subr.mxu0 0.0
      %731 = vmatpush1.msra.mxu0 0.0
      %732 = vmatprep.subr.mxu0 0.0
      %733 = vmatpush1.msra.mxu0 0.0
      %734 = vmatprep.subr.mxu0 0.0
      %735 = vmatpush1.msra.mxu0 0.0
      %736 = vmatprep.subr.mxu0 0.0
      %737 = vmatpush1.msra.mxu0 0.0
      %738 = vmatprep.subr.mxu0 0.0
      %739 = vmatpush1.msra.mxu0 0.0
      %740 = vmatprep.subr.mxu0 0.0
      %741 = vmatpush1.msra.mxu0 0.0
      %742 = vmatprep.mubr.f32.mxu0 0.0
      %743 = vmatmul.mubr.f32.gmra.mrb[0].mxu0 %v673
      %v744 = vpop.f32.mrb[0].mxu0
      %v745 = vadd.f32 0.0, %v744
      %v746 = vpop.f32.mrb[0].mxu0
      %747 = vmatprep.mubr.f32.mxu0 0.0
      %748 = vmatmul.mubr.f32.gmra.mrb[0].mxu0 %v676
      %v749 = vpop.f32.mrb[0].mxu0
      %v750 = vadd.f32 0.0, %v749
      %v751 = vpop.f32.mrb[0].mxu0
      %752 = vdwg.mxu0
      %v753 = vadd.f32 %v577, %v745
      %v754 = vadd.f32 %v582, %v750
      %s755 = scalar_lea.vmem %s1, 192
      %v756 = vld [vmem:[%s755] sm:$0xff]
      %v757 = vld [vmem:[%s755 + $0x8] sm:$0xff]
      %v758 = vld [vmem:[%s755 + $0x10] sm:$0xff]
      %v759 = vld [vmem:[%s755 + $0x18] sm:$0xff]
      %v760 = vld [vmem:[%s755 + $0x20] sm:$0xff]
      %v761 = vld [vmem:[%s755 + $0x28] sm:$0xff]
      %v762 = vld [vmem:[%s755 + $0x30] sm:$0xff]
      %v763 = vld [vmem:[%s755 + $0x38] sm:$0xff]
      %764 = vmatprep.subr.mxu0 0.0
      %765 = vmatpush1.msra.mxu0 %v756
      %766 = vmatprep.subr.mxu0 0.0
      %767 = vmatpush1.msra.mxu0 %v757
      %768 = vmatprep.subr.mxu0 0.0
      %769 = vmatpush1.msra.mxu0 %v758
      %770 = vmatprep.subr.mxu0 0.0
      %771 = vmatpush1.msra.mxu0 %v759
      %772 = vmatprep.subr.mxu0 0.0
      %773 = vmatpush1.msra.mxu0 %v760
      %774 = vmatprep.subr.mxu0 0.0
      %775 = vmatpush1.msra.mxu0 %v761
      %776 = vmatprep.subr.mxu0 0.0
      %777 = vmatpush1.msra.mxu0 %v762
      %778 = vmatprep.subr.mxu0 0.0
      %779 = vmatpush1.msra.mxu0 %v763
      %780 = vmatprep.subr.mxu0 0.0
      %781 = vmatpush1.msra.mxu0 0.0
      %782 = vmatprep.subr.mxu0 0.0
      %783 = vmatpush1.msra.mxu0 0.0
      %784 = vmatprep.subr.mxu0 0.0
      %785 = vmatpush1.msra.mxu0 0.0
      %786 = vmatprep.subr.mxu0 0.0
      %787 = vmatpush1.msra.mxu0 0.0
      %788 = vmatprep.subr.mxu0 0.0
      %789 = vmatpush1.msra.mxu0 0.0
      %790 = vmatprep.subr.mxu0 0.0
      %791 = vmatpush1.msra.mxu0 0.0
      %792 = vmatprep.subr.mxu0 0.0
      %793 = vmatpush1.msra.mxu0 0.0
      %794 = vmatprep.subr.mxu0 0.0
      %795 = vmatpush1.msra.mxu0 0.0
      %796 = vmatprep.subr.mxu0 0.0
      %797 = vmatpush1.msra.mxu0 0.0
      %798 = vmatprep.subr.mxu0 0.0
      %799 = vmatpush1.msra.mxu0 0.0
      %800 = vmatprep.subr.mxu0 0.0
      %801 = vmatpush1.msra.mxu0 0.0
      %802 = vmatprep.subr.mxu0 0.0
      %803 = vmatpush1.msra.mxu0 0.0
      %804 = vmatprep.subr.mxu0 0.0
      %805 = vmatpush1.msra.mxu0 0.0
      %806 = vmatprep.subr.mxu0 0.0
      %807 = vmatpush1.msra.mxu0 0.0
      %808 = vmatprep.subr.mxu0 0.0
      %809 = vmatpush1.msra.mxu0 0.0
      %810 = vmatprep.subr.mxu0 0.0
      %811 = vmatpush1.msra.mxu0 0.0
      %812 = vmatprep.subr.mxu0 0.0
      %813 = vmatpush1.msra.mxu0 0.0
      %814 = vmatprep.subr.mxu0 0.0
      %815 = vmatpush1.msra.mxu0 0.0
      %816 = vmatprep.subr.mxu0 0.0
      %817 = vmatpush1.msra.mxu0 0.0
      %818 = vmatprep.subr.mxu0 0.0
      %819 = vmatpush1.msra.mxu0 0.0
      %820 = vmatprep.subr.mxu0 0.0
      %821 = vmatpush1.msra.mxu0 0.0
      %822 = vmatprep.subr.mxu0 0.0
      %823 = vmatpush1.msra.mxu0 0.0
      %824 = vmatprep.subr.mxu0 0.0
      %825 = vmatpush1.msra.mxu0 0.0
      %826 = vmatprep.subr.mxu0 0.0
      %827 = vmatpush1.msra.mxu0 0.0
      %828 = vmatprep.mubr.f32.mxu0 0.0
      %829 = vmatmul.mubr.f32.gmra.mrb[0].mxu0 %v253
      %v830 = vpop.f32.mrb[0].mxu0
      %v831 = vadd.f32 0.0, %v830
      %v832 = vpop.f32.mrb[0].mxu0
      %833 = vmatprep.mubr.f32.mxu0 0.0
      %834 = vmatmul.mubr.f32.gmra.mrb[0].mxu0 %v256
      %v835 = vpop.f32.mrb[0].mxu0
      %v836 = vadd.f32 0.0, %v835
      %v837 = vpop.f32.mrb[0].mxu0
      %838 = vdwg.mxu0
      %s839 = scalar_lea.vmem %s230, 48
      %v840 = vld [vmem:[%s839] sm:$0xff]
      %v841 = vld [vmem:[%s839 + $0x8] sm:$0xff]
      %v843 = vsel %vm422, %v840, 0
      %v846 = vsel %vm422, %v841, 0
      %848 = vmatprep.subr.mxu0 0.0
      %849 = vmatpush1.msra.mxu0 %v831
      %850 = vmatprep.subr.mxu0 0.0
      %851 = vmatpush1.msra.mxu0 %v836
      %852 = vmatprep.subr.mxu0 0.0
      %853 = vmatpush1.msra.mxu0 0.0
      %854 = vmatprep.subr.mxu0 0.0
      %855 = vmatpush1.msra.mxu0 0.0
      %856 = vmatprep.subr.mxu0 0.0
      %857 = vmatpush1.msra.mxu0 0.0
      %858 = vmatprep.subr.mxu0 0.0
      %859 = vmatpush1.msra.mxu0 0.0
      %860 = vmatprep.subr.mxu0 0.0
      %861 = vmatpush1.msra.mxu0 0.0
      %862 = vmatprep.subr.mxu0 0.0
      %863 = vmatpush1.msra.mxu0 0.0
      %864 = vmatprep.subr.mxu0 0.0
      %865 = vmatpush1.msra.mxu0 0.0
      %866 = vmatprep.subr.mxu0 0.0
      %867 = vmatpush1.msra.mxu0 0.0
      %868 = vmatprep.subr.mxu0 0.0
      %869 = vmatpush1.msra.mxu0 0.0
      %870 = vmatprep.subr.mxu0 0.0
      %871 = vmatpush1.msra.mxu0 0.0
      %872 = vmatprep.subr.mxu0 0.0
      %873 = vmatpush1.msra.mxu0 0.0
      %874 = vmatprep.subr.mxu0 0.0
      %875 = vmatpush1.msra.mxu0 0.0
      %876 = vmatprep.subr.mxu0 0.0
      %877 = vmatpush1.msra.mxu0 0.0
      %878 = vmatprep.subr.mxu0 0.0
      %879 = vmatpush1.msra.mxu0 0.0
      %880 = vmatprep.subr.mxu0 0.0
      %881 = vmatpush1.msra.mxu0 0.0
      %882 = vmatprep.subr.mxu0 0.0
      %883 = vmatpush1.msra.mxu0 0.0
      %884 = vmatprep.subr.mxu0 0.0
      %885 = vmatpush1.msra.mxu0 0.0
      %886 = vmatprep.subr.mxu0 0.0
      %887 = vmatpush1.msra.mxu0 0.0
      %888 = vmatprep.subr.mxu0 0.0
      %889 = vmatpush1.msra.mxu0 0.0
      %890 = vmatprep.subr.mxu0 0.0
      %891 = vmatpush1.msra.mxu0 0.0
      %892 = vmatprep.subr.mxu0 0.0
      %893 = vmatpush1.msra.mxu0 0.0
      %894 = vmatprep.subr.mxu0 0.0
      %895 = vmatpush1.msra.mxu0 0.0
      %896 = vmatprep.subr.mxu0 0.0
      %897 = vmatpush1.msra.mxu0 0.0
      %898 = vmatprep.subr.mxu0 0.0
      %899 = vmatpush1.msra.mxu0 0.0
      %900 = vmatprep.subr.mxu0 0.0
      %901 = vmatpush1.msra.mxu0 0.0
      %902 = vmatprep.subr.mxu0 0.0
      %903 = vmatpush1.msra.mxu0 0.0
      %904 = vmatprep.subr.mxu0 0.0
      %905 = vmatpush1.msra.mxu0 0.0
      %906 = vmatprep.subr.mxu0 0.0
      %907 = vmatpush1.msra.mxu0 0.0
      %908 = vmatprep.subr.mxu0 0.0
      %909 = vmatpush1.msra.mxu0 0.0
      %910 = vmatprep.subr.mxu0 0.0
      %911 = vmatpush1.msra.mxu0 0.0
      %912 = vmatprep.mubr.f32.mxu0 0.0
      %913 = vmatmul.mubr.f32.gmra.mrb[0].mxu0 %v843
      %v914 = vpop.f32.mrb[0].mxu0
      %v915 = vadd.f32 0.0, %v914
      %v916 = vpop.f32.mrb[0].mxu0
      %917 = vmatprep.mubr.f32.mxu0 0.0
      %918 = vmatmul.mubr.f32.gmra.mrb[0].mxu0 %v846
      %v919 = vpop.f32.mrb[0].mxu0
      %v920 = vadd.f32 0.0, %v919
      %v921 = vpop.f32.mrb[0].mxu0
      %922 = vdwg.mxu0
      %v923 = vadd.f32 %v753, %v915
      %v924 = vadd.f32 %v754, %v920
      %v925 = vld [vmem:[%s3] sm:$0x1]
      %v927 = vlaneseq
      %v928 = vshrl.u32 %v927, 7
      %v929 = vsub.s32 0, %v928
      %v930 = vrot.slane %v925, %v929
      %v932 = vadd.f32 %v923, %v930
      %v933 = vadd.f32 %v924, %v930
      %934 = vst [vmem:[%s239] sm:$0xff] %v932
      %935 = vst [vmem:[%s239 + $0x8] sm:$0xff] %v933
      %s936 = smul.u32 2, %s20
      %p937 = scmp.lt.s32.totalorder %s19, 1
      %s938 = scalar_select %p937, %s19, 1
      %p939 = scmp.lt.s32.totalorder %s936, 3
      %s940 = scalar_select %p939, %s936, 3
      %s941 = smul.addr %s938, 4
      %s942 = sadd.s32 %s940, %s941
      %s943 = smul.addr %s942, 8
      %s944 = scalar_lea.vmem %s4, %s943
      // Predicated region
      $region37: #{upsample_forward.1} parent=35 // pred_check
        %p945 = pneg %p141
      $region38: #{upsample_forward.1} parent=35 // pred_check_branch
        %947 = sbr.rel (%p945) target = $region40
      $region39: #{upsample_forward.1} parent=35 // pred_region
        %s948 = smul.u32 2, %s20
      $region40: #{upsample_forward.1} parent=35 // pred_fallthru
        _
    $region36: #{upsample_forward.1} parent=5 // pred_fallthru
      _
    %p949 = scmp.le.s32.totalorder 2, %s10
    // Predicated region
    $region41: #{upsample_forward.1} parent=5 // pred_check
      %p950 = pneg %p949
    $region42: #{upsample_forward.1} parent=5 // pred_check_branch
      %952 = sbr.rel (%p950) target = $region44
    $region43: #{upsample_forward.1} parent=5 // pred_region
      %s953 = ssub.s32 %s10, 2
      // Predicated region
      $region45: #{upsample_forward.1} parent=43 // pred_check
        %p954 = pneg %p147
      $region46: #{upsample_forward.1} parent=43 // pred_check_branch
        %956 = sbr.rel (%p954) target = $region48
      $region47: #{upsample_forward.1} parent=43 // pred_region
        %s957 = smul.u32 2, %s22
        %p958 = scmp.lt.s32.totalorder %s21, 1
        %s959 = scalar_select %p958, %s21, 1
        %p960 = scmp.lt.s32.totalorder %s957, 3
        %s961 = scalar_select %p960, %s957, 3
        %s962 = smul.addr %s959, 4
        %s963 = sadd.s32 %s961, %s962
        %s964 = smul.addr %s963, 8
        %s965 = scalar_lea.vmem %s4, %s964
      $region48: #{upsample_forward.1} parent=43 // pred_fallthru
        _
    $region44: #{upsample_forward.1} parent=5 // pred_fallthru
      _
  $region6: #{upsample_forward.1} parent=0 // loop_footer
    %s14 = sadd.s32 1, %s10
  $region7: #{upsample_forward.1} parent=0 // loop_footer_branch
    %9 = sbr.rel target = $region3
  $region8: #{upsample_forward.1} parent=0 // loop_exit
    _

</llo_original>
